<compile_context>
chip_gen: v7x
topology: tpu7x:2x2x1
jax: 0.10.0
libtpu: 0.0.40
codegen_flags: <defaults>
</compile_context>

<pallas_src>
import functools

import jax
import jax.numpy as jnp
from jax.experimental import pallas as pl
from jax.experimental.pallas import tpu as pltpu


def adain_kernel(x_ref, ms_ref, o_ref, *, c_true):
    # x_ref:  (TN, C)  content rows (logical C lanes; lane padding handled by Mosaic)
    # ms_ref: (TN, 2)  f32 style stats: col 0 = mu, col 1 = sigma
    x = x_ref[...]                                       # (TN, C), input dtype
    ms = ms_ref[...]                                     # (TN, 2), f32
    mu = ms[:, 0:1]                                      # (TN, 1) f32
    sigma = ms[:, 1:2]                                   # (TN, 1) f32

    # eq. 5: per-row mean; f32 accumulation over the logical C lanes only.
    mean = jnp.sum(x, axis=1, keepdims=True, dtype=jnp.float32) / c_true   # (TN, 1)

    # Elementwise path in the input dtype (bf16 native on v6e/v7x VALUs).
    centered = x - mean.astype(x.dtype)                  # (TN, C)

    # eq. 6: biased variance, torch's eps-on-the-sum form; f32 accumulation.
    sumsq = jnp.sum(centered * centered, axis=1, keepdims=True, dtype=jnp.float32)
    var = (sumsq + 2.3e-08) / c_true
    inv_std = jax.lax.rsqrt(var)                         # (TN, 1) f32, EUP slot

    # eq. 8 as a single FMA per element:
    #   sigma * ((x - mean)/std + mu) == centered * (sigma/std) + sigma*mu
    scale = (sigma * inv_std).astype(x.dtype)            # (TN, 1)
    bias = (sigma * mu).astype(x.dtype)                  # (TN, 1)
    o_ref[...] = (centered * scale + bias).astype(o_ref.dtype)


def _choose_tn(n, c, itemsize, *, sublane, vmem_budget_bytes=24 * 1024 * 1024):
    """Row-tile size: largest sublane-multiple whose full VMEM working set fits
    the budget (conservative for v7x's 64 MiB VMEM), with >=2 grid steps when
    the problem allows it (so v7x's two TensorCores both get work)."""
    c_pad = pl.cdiv(c, 128) * 128        # physical lane-padded width of x/out tiles
    per_row = (
        2 * c_pad * itemsize             # x block, double-buffered
        + 2 * c_pad * itemsize           # out block, double-buffered
        + 2 * 128 * 4                    # ms block (lane-padded to 128), f32, 2 buffers
        + 3 * c_pad * 4                  # in-kernel full-tile temporaries (f32-ish)
    )
    tn = max(sublane, vmem_budget_bytes // per_row)
    tn = (tn // sublane) * sublane

    n_ceil = pl.cdiv(n, sublane) * sublane
    if tn >= n_ceil:
        # Whole problem fits in one tile: split into 2 steps if possible so the
        # "parallel" grid axis can be sharded across v7x's two TensorCores.
        if n_ceil >= 2 * sublane:
            tn = pl.cdiv(n_ceil // 2, sublane) * sublane
        else:
            tn = n_ceil
    return max(sublane, tn)


def adain(x, mu, sigma):
    """x: (N, C); mu, sigma: (N, 1) or (N,) (the torch forward does .squeeze(1))."""
    N, C = x.shape
    dtype = x.dtype
    itemsize = jnp.dtype(dtype).itemsize
    sublane = {4: 8, 2: 16, 1: 32}.get(itemsize, 8)

    tn = _choose_tn(N, C, itemsize, sublane=sublane)
    grid = (pl.cdiv(N, tn),)

    # Style stats merged into one (N, 2) f32 slab: one tiny DMA per grid step,
    # kept in f32 regardless of x dtype (no precision loss on mu/sigma).
    ms = jnp.concatenate(
        [jnp.reshape(mu, (N, 1)).astype(jnp.float32),
         jnp.reshape(sigma, (N, 1)).astype(jnp.float32)],
        axis=1,
    )

    kernel = functools.partial(adain_kernel, c_true=C)

    cost = pl.CostEstimate(
        flops=7 * N * C,
        transcendentals=N,
        bytes_accessed=2 * N * C * itemsize + N * 2 * 4,
    )

    return pl.pallas_call(
        kernel,
        out_shape=jax.ShapeDtypeStruct((N, C), dtype),
        grid=grid,
        in_specs=[
            pl.BlockSpec((tn, C), lambda i: (i, 0)),   # full feature dim stays on lanes
            pl.BlockSpec((tn, 2), lambda i: (i, 0)),   # (mu, sigma) per row
        ],
        out_specs=pl.BlockSpec((tn, C), lambda i: (i, 0)),
        compiler_params=pltpu.CompilerParams(
            dimension_semantics=("parallel",),
            vmem_limit_bytes=48 * 1024 * 1024,   # safe on v7x (64 MiB), ample on v5e/v6e
        ),
        cost_estimate=cost,
    )(x, ms)


def adain_ref(x, mu, sigma):
    """Pure-JAX reference mirroring the torch code exactly."""
    c = x.shape[1]
    mean = jnp.sum(x, axis=1) / c                                        # (N,)
    x_red = x.T - mean                                                   # (C, N)
    std = jnp.sqrt((jnp.sum((x_red.T) ** 2, axis=1) + 2.3e-08) / c)      # (N,)
    x_norm = x_red / std                                                 # (C, N)
    return (jnp.squeeze(sigma, 1) * (x_norm + jnp.squeeze(mu, 1))).T     # (N, C)


if __name__ == "__main__":
    key = jax.random.PRNGKey(0)
    k1, k2, k3, k4, k5, k6, k7, k8, k9 = jax.random.split(key, 9)

    # Case 1: aligned (full-lane C, sublane-aligned N), single-ish grid.
    N, C = 8, 128
    x = jax.random.normal(k1, (N, C), dtype=jnp.float32)
    mu = jax.random.normal(k2, (N, 1), dtype=jnp.float32)
    sigma = jax.random.uniform(k3, (N, 1), dtype=jnp.float32) + 0.5
    out = jax.block_until_ready(adain(x, mu, sigma))
    ref = adain_ref(x, mu, sigma)
    assert out.shape == (N, C)
    assert jnp.allclose(out, ref, atol=1e-5, rtol=1e-5), "mismatch (aligned)"

    # Case 2: unaligned N and sub-128 C — exercises the ragged last row-block
    # and the logical-lane reduction with no host padding.
    N2, C2 = 10, 96
    x2 = jax.random.normal(k4, (N2, C2), dtype=jnp.float32)
    mu2 = jax.random.normal(k5, (N2, 1), dtype=jnp.float32)
    sigma2 = jax.random.uniform(k6, (N2, 1), dtype=jnp.float32) + 0.5
    out2 = jax.block_until_ready(adain(x2, mu2, sigma2))
    ref2 = adain_ref(x2, mu2, sigma2)
    assert out2.shape == (N2, C2)
    assert jnp.allclose(out2, ref2, atol=1e-5, rtol=1e-5), "mismatch (ragged N, small C)"

    # Case 3: both dims unaligned, multi-step grid (>=2 "parallel" steps).
    N3, C3 = 300, 257
    x3 = jax.random.normal(k7, (N3, C3), dtype=jnp.float32)
    mu3 = jax.random.normal(k8, (N3, 1), dtype=jnp.float32)
    sigma3 = jax.random.uniform(k9, (N3, 1), dtype=jnp.float32) + 0.5
    out3 = jax.block_until_ready(adain(x3, mu3, sigma3))
    ref3 = adain_ref(x3, mu3, sigma3)
    assert out3.shape == (N3, C3)
    assert jnp.allclose(out3, ref3, atol=1e-5, rtol=1e-5), "mismatch (ragged N and C)"

    print("KERNEL_OK")
</pallas_src>

<mosaic_0001>
module attributes {stable_mosaic.version = 11 : i64} {
  func.func @adain_kernel(%arg0: i32, %arg1: memref<8x128xf32, #tpu.memory_space<vmem>>, %arg2: memref<8x2xf32, #tpu.memory_space<vmem>>, %arg3: memref<8x128xf32, #tpu.memory_space<vmem>>) attributes {dimension_semantics = [#tpu.dimension_semantics<parallel>], iteration_bounds = array<i64: 1>, scalar_prefetch = 0 : i64, scratch_operands = 0 : i64, tpu.core_type = #tpu.core_type<tc>, window_params = [{transform_indices = @transform_0, window_bounds = array<i64: 8, 128>}, {transform_indices = @transform_1, window_bounds = array<i64: 8, 2>}, {transform_indices = @transform_2, window_bounds = array<i64: 8, 128>}]} {
    %c0 = arith.constant 0 : index
    %c0_0 = arith.constant 0 : index
    %0 = vector.load %arg1[%c0, %c0_0] : memref<8x128xf32, #tpu.memory_space<vmem>>, vector<8x128xf32>
    %c0_1 = arith.constant 0 : index
    %c0_2 = arith.constant 0 : index
    %1 = vector.load %arg2[%c0_1, %c0_2] : memref<8x2xf32, #tpu.memory_space<vmem>>, vector<8x2xf32>
    %2 = vector.extract_strided_slice %1 {offsets = [0, 0], sizes = [8, 1], strides = [1, 1]} : vector<8x2xf32> to vector<8x1xf32>
    %3 = vector.extract_strided_slice %1 {offsets = [0, 1], sizes = [8, 1], strides = [1, 1]} : vector<8x2xf32> to vector<8x1xf32>
    %cst = arith.constant dense<0.000000e+00> : vector<8xf32>
    %4 = vector.multi_reduction <add>, %0, %cst [1] : vector<8x128xf32> to vector<8xf32>
    %5 = vector.shape_cast %4 : vector<8xf32> to vector<8x1xf32>
    %cst_3 = arith.constant 1.280000e+02 : f32
    %6 = vector.broadcast %cst_3 : f32 to vector<8x1xf32>
    %7 = arith.divf %5, %6 : vector<8x1xf32>
    %8 = vector.broadcast %7 : vector<8x1xf32> to vector<8x128xf32>
    %9 = arith.subf %0, %8 : vector<8x128xf32>
    %10 = arith.mulf %9, %9 : vector<8x128xf32>
    %cst_4 = arith.constant dense<0.000000e+00> : vector<8xf32>
    %11 = vector.multi_reduction <add>, %10, %cst_4 [1] : vector<8x128xf32> to vector<8xf32>
    %12 = vector.shape_cast %11 : vector<8xf32> to vector<8x1xf32>
    %cst_5 = arith.constant 2.300000e-08 : f32
    %13 = vector.broadcast %cst_5 : f32 to vector<8x1xf32>
    %14 = arith.addf %12, %13 : vector<8x1xf32>
    %cst_6 = arith.constant 1.280000e+02 : f32
    %15 = vector.broadcast %cst_6 : f32 to vector<8x1xf32>
    %16 = arith.divf %14, %15 : vector<8x1xf32>
    %17 = math.rsqrt %16 : vector<8x1xf32>
    %18 = arith.mulf %3, %17 : vector<8x1xf32>
    %19 = arith.mulf %3, %2 : vector<8x1xf32>
    %20 = vector.broadcast %18 : vector<8x1xf32> to vector<8x128xf32>
    %21 = arith.mulf %9, %20 : vector<8x128xf32>
    %22 = vector.broadcast %19 : vector<8x1xf32> to vector<8x128xf32>
    %23 = arith.addf %21, %22 : vector<8x128xf32>
    %c0_7 = arith.constant 0 : index
    %c0_8 = arith.constant 0 : index
    %24 = vector.load %arg3[%c0_7, %c0_8] : memref<8x128xf32, #tpu.memory_space<vmem>>, vector<8x128xf32>
    tpu.vector_store %arg3[%c0_7, %c0_8], %23 {strides = array<i32>} : memref<8x128xf32, #tpu.memory_space<vmem>>, vector<8x128xf32>,
    return
  }
  func.func @transform_0(%arg0: i32) -> (i32, i32) {
    %c0_i32 = arith.constant 0 : i32
    %c0_i32_0 = arith.constant 0 : i32
    return %arg0, %c0_i32 : i32, i32
  }
  func.func @transform_1(%arg0: i32) -> (i32, i32) {
    %c0_i32 = arith.constant 0 : i32
    %c0_i32_0 = arith.constant 0 : i32
    return %arg0, %c0_i32 : i32, i32
  }
  func.func @transform_2(%arg0: i32) -> (i32, i32) {
    %c0_i32 = arith.constant 0 : i32
    %c0_i32_0 = arith.constant 0 : i32
    return %arg0, %c0_i32 : i32, i32
  }
}

</mosaic_0001>

<llo_original>
// kernel: tpu_custom_call.1
$region0: #{tpu_custom_call.1}
  #allocation0 [shape = 'u32[]', space=smem, size = 0x4, offset = 0x4, fixed_abs, tag = 'smem constant byte address 0x4 - core index']
  #allocation1 [shape = 'u32[144,128]{1,0:T(1,128)}', space=vmem, size = 0x12000, scoped, tag = 'internal scratch']
  %s0 = inlined_call_operand.vmem [shape: f32[8,128], index: 0, kind: input, shape index: {}]
  %s1 = inlined_call_operand.vmem [shape: f32[8,2], index: 1, kind: input, shape index: {}]
  %s2 = inlined_call_operand.hbm [shape: f32[8,128], index: 2, kind: output, shape index: {}]
  %s3 = sld [smem:[#allocation0]]
  $region18: #{tpu_custom_call.1} parent=0
    _
  %s5 = ssub.s32 1, %s3
  %s6 = scalar_select 0, %s5, %s3
  $region1: #{tpu_custom_call.1} parent=0
    #allocation2 [shape = 'u8[4096]{0}', space=vmem, size = 0x1000, scoped, tag = 'output window, operand 0, single buffered']
    #allocation3 [shape = 's32[1]{0}', space=sflag, size = 0x4, scoped, tag = 'scoped memory for tpu_custom_call.1']
    %7 = vsyncpa [#allocation3], 0
    // Predicated region
    $region2: #{tpu_custom_call.1} parent=1 // pred_check
      _
    $region3: #{tpu_custom_call.1} parent=1 // pred_check_branch
      %9 = sbr.rel (0) target = $region5
    $region4: #{tpu_custom_call.1} parent=1 // pred_region
      _
    $region5: #{tpu_custom_call.1} parent=1 // pred_fallthru
      _
    // Predicated region
    $region6: #{tpu_custom_call.1} parent=1 // pred_check
      _
    $region7: #{tpu_custom_call.1} parent=1 // pred_check_branch
      %11 = sbr.rel (0) target = $region9
    $region8: #{tpu_custom_call.1} parent=1 // pred_region
      _
    $region9: #{tpu_custom_call.1} parent=1 // pred_fallthru
      _
    %v12 = vld [vmem:[%s0] sm:$0xff]
    %v13 = vld [vmem:[%s1] sm:$0xff]
    %14 = vadd.xlane.f32.xlu0 %v12
    %v15 = vpop.xlane.xlu0 %14
    %v16 = vrcp.pop 128.0
    %v17 = vmul.f32 %v15, %v16
    %v18 = vsub.f32 %v12, %v17
    %v19 = vmul.f32 %v18, %v18
    %20 = vadd.xlane.f32.xlu0 %v19
    %v21 = vpop.xlane.xlu0 %20
    %v22 = vadd.f32 %v21, 2.3e-08
    %v23 = vmul.f32 %v22, %v16
    %v24 = vrsqrt.pop %v23
    %v25 = vmul.f32 %v13, %v24
    %27 = vrot.lane.b32.xlu0 %v13, 1
    %v28 = vpop.permute.xlu0 %27
    %v30 = vmul.f32 %v13, %v28
    %32 = vset.pattern.permute.xlu0 1
    %33 = vperm.xlu0 %32, %v25
    %v34 = vpop.permute.xlu0 %33
    %v36 = vmul.f32 %v18, %v34
    %38 = vset.pattern.permute.xlu0 1
    %39 = vperm.xlu0 %38, %v30
    %v40 = vpop.permute.xlu0 %39
    %v42 = vadd.f32 %v36, %v40
    %43 = vst [vmem:[#allocation2] sm:$0xff] %v42
    // Predicated region
    $region10: #{tpu_custom_call.1} parent=1 // pred_check
      _
    $region11: #{tpu_custom_call.1} parent=1 // pred_check_branch
      %45 = sbr.rel (0) target = $region13
    $region12: #{tpu_custom_call.1} parent=1 // pred_region
      %s47 = ssub.s32 128, 128
      %48 = vsyncadd [#allocation3], %s47
      %s50 = sshll.u32 [#allocation2], 4
      %s51 = int_to_ptr.vmem [resolvable:$true] %s50
      %53 = dma.vmem_to_hbm [thread:$0]  %s51, 128, %s2, [#allocation3]
    $region13: #{tpu_custom_call.1} parent=1 // pred_fallthru
      _
    // Predicated region
    $region14: #{tpu_custom_call.1} parent=1 // pred_check
      _
    $region15: #{tpu_custom_call.1} parent=1 // pred_check_branch
      %55 = sbr.rel (0) target = $region17
    $region16: #{tpu_custom_call.1} parent=1 // pred_region
      %56 = dma.done [#allocation3], 128
    $region17: #{tpu_custom_call.1} parent=1 // pred_fallthru
      _
    %57 = vsyncpa [#allocation3], 1

</llo_original>
